<compile_context>
chip_gen: v5e
topology: v5e:2x2
jax: 0.10.0
libtpu: 0.0.40
codegen_flags: <defaults>
</compile_context>

<pallas_src>
import functools

import jax
import jax.numpy as jnp
import numpy as np
from jax.experimental import pallas as pl
from jax.experimental.pallas import tpu as pltpu

LANE = 128     # vreg lane width (last dim)
SUBLANE = 8    # f32 sublane count (second-to-last dim)


def _round_up(x, m):
    return (x + m - 1) // m * m


# ---------------------------------------------------------------------------
# Kernel: fused embedding-gather + LSTM cell (seq_len=1) + output Linear
# ---------------------------------------------------------------------------
def decoder_kernel(ids_ref, h_ref, c_ref, emb_ref, wcat_ref, b_ref,
                   wfc_ref, bfc_ref, out_ref, hn_ref, cn_ref):
    """All shapes are padded/tile-aligned:

    ids_ref:  (Bp, 1)        int32 token ids
    h_ref:    (Bp, Hp)       previous hidden state
    c_ref:    (Bp, Hp)       previous cell state
    emb_ref:  (Vp, Ep)       embedding table
    wcat_ref: (Ep+Hp, 4*Hp)  [W_ih ; W_hh] transposed, gate-blocked to 128 lanes
    b_ref:    (1, 4*Hp)      b_ih + b_hh, gate-blocked
    wfc_ref:  (Hp, Op)       fc weights (transposed)
    bfc_ref:  (1, Op)        fc bias
    out_ref:  (Bp, Op)       logits
    hn_ref:   (Bp, Hp)       new hidden state (aliases h_ref's HBM buffer)
    cn_ref:   (Bp, Hp)       new cell state   (aliases c_ref's HBM buffer)
    """
    Bp = ids_ref.shape[0]
    Vp = emb_ref.shape[0]
    Hp = h_ref.shape[-1]

    # Embedding gather fused as a one-hot matmul (exact row select on the MXU).
    ids = ids_ref[...]                                                 # (Bp, 1)
    onehot = (jax.lax.broadcasted_iota(jnp.int32, (Bp, Vp), 1) == ids
              ).astype(jnp.float32)                                    # (Bp, Vp)
    x = jnp.dot(onehot, emb_ref[...],
                preferred_element_type=jnp.float32)                    # (Bp, Ep)
    # dropout (eval mode) = identity.

    h = h_ref[...]
    c = c_ref[...]

    # Single fused gate matmul: [x | h] @ [W_ih ; W_hh] + (b_ih + b_hh).
    xh = jnp.concatenate([x, h], axis=-1)                              # (Bp, Ep+Hp)
    gates = (jnp.dot(xh, wcat_ref[...], preferred_element_type=jnp.float32)
             + b_ref[...])                                             # (Bp, 4*Hp)

    # Each gate occupies a 128-lane-aligned column block (Hp = 128).
    i_g = jax.nn.sigmoid(gates[:, 0 * Hp:1 * Hp])
    f_g = jax.nn.sigmoid(gates[:, 1 * Hp:2 * Hp])
    g_g = jnp.tanh(gates[:, 2 * Hp:3 * Hp])
    o_g = jax.nn.sigmoid(gates[:, 3 * Hp:4 * Hp])

    c_new = f_g * c + i_g * g_g
    h_new = o_g * jnp.tanh(c_new)

    cn_ref[...] = c_new
    hn_ref[...] = h_new
    out_ref[...] = (jnp.dot(h_new, wfc_ref[...],
                            preferred_element_type=jnp.float32)
                    + bfc_ref[...])


# ---------------------------------------------------------------------------
# Parameters (raw PyTorch layout) and one-time kernel-layout preparation
# ---------------------------------------------------------------------------
def make_decoder_params(key, input_size, embedding_size, hidden_size, output_size):
    """Raw parameters in PyTorch layout (nn.Embedding / nn.LSTM / nn.Linear)."""
    ks = jax.random.split(key, 7)
    scale = 0.1
    return {
        "emb":  scale * jax.random.normal(ks[0], (input_size, embedding_size), jnp.float32),
        "w_ih": scale * jax.random.normal(ks[1], (4 * hidden_size, embedding_size), jnp.float32),
        "w_hh": scale * jax.random.normal(ks[2], (4 * hidden_size, hidden_size), jnp.float32),
        "b_ih": scale * jax.random.normal(ks[3], (4 * hidden_size,), jnp.float32),
        "b_hh": scale * jax.random.normal(ks[4], (4 * hidden_size,), jnp.float32),
        "w_fc": scale * jax.random.normal(ks[5], (output_size, hidden_size), jnp.float32),
        "b_fc": scale * jax.random.normal(ks[6], (output_size,), jnp.float32),
    }


def prepare_decoder_params(raw):
    """One-time prep: transpose, fuse LSTM biases, pad everything to (8,128) tiles."""
    V, E = raw["emb"].shape
    H = raw["w_hh"].shape[1]
    O = raw["w_fc"].shape[0]

    Vp = _round_up(V, LANE)
    Ep = _round_up(E, LANE)
    Hp = _round_up(H, LANE)
    Op = _round_up(O, LANE)

    def pad2(a, rows, cols):
        return jnp.pad(a, ((0, rows - a.shape[0]), (0, cols - a.shape[1])))

    # Embedding table (V, E) -> (Vp, Ep); padded rows are never selected.
    emb_p = pad2(raw["emb"], Vp, Ep)

    # LSTM weights transposed to (in, 4H); each gate padded to its own 128-lane block.
    w_ih_t = raw["w_ih"].T                    # (E, 4H)
    w_hh_t = raw["w_hh"].T                    # (H, 4H)
    b_fused = (raw["b_ih"] + raw["b_hh"]).reshape(1, 4 * H)

    def pad_gate_cols(w, rows_p):
        parts = [pad2(w[:, k * H:(k + 1) * H], rows_p, Hp) for k in range(4)]
        return jnp.concatenate(parts, axis=1)  # (rows_p, 4*Hp)

    w_cat = jnp.concatenate([pad_gate_cols(w_ih_t, Ep),
                             pad_gate_cols(w_hh_t, Hp)], axis=0)       # (Ep+Hp, 4*Hp)
    b_p = jnp.concatenate([pad2(b_fused[:, k * H:(k + 1) * H], 1, Hp)
                           for k in range(4)], axis=1)                 # (1, 4*Hp)

    w_fc_p = pad2(raw["w_fc"].T, Hp, Op)                               # (Hp, Op)
    b_fc_p = pad2(raw["b_fc"].reshape(1, O), 1, Op)                    # (1, Op)

    return {"emb": emb_p, "w_cat": w_cat, "b": b_p,
            "w_fc": w_fc_p, "b_fc": b_fc_p}


# ---------------------------------------------------------------------------
# Forward wrapper
# ---------------------------------------------------------------------------
@functools.partial(jax.jit, static_argnames=("out_size",))
def decoder_forward(kparams, input_data, ht, ct, *, out_size):
    """input_data: (B,) int32 ; ht, ct: (1, B, H) float32."""
    B = input_data.shape[0]
    H = ht.shape[-1]
    Hp, Op = kparams["w_fc"].shape
    Bp = _round_up(B, SUBLANE)

    ids_p = jnp.pad(input_data.astype(jnp.int32), (0, Bp - B)).reshape(Bp, 1)
    h0 = jnp.pad(ht.reshape(B, H), ((0, Bp - B), (0, Hp - H)))
    c0 = jnp.pad(ct.reshape(B, H), ((0, Bp - B), (0, Hp - H)))

    vmem = pl.BlockSpec(memory_space=pltpu.MemorySpace.VMEM)
    out_p, hn_p, cn_p = pl.pallas_call(
        decoder_kernel,
        out_shape=(
            jax.ShapeDtypeStruct((Bp, Op), jnp.float32),
            jax.ShapeDtypeStruct((Bp, Hp), jnp.float32),
            jax.ShapeDtypeStruct((Bp, Hp), jnp.float32),
        ),
        in_specs=[vmem] * 8,
        out_specs=(vmem, vmem, vmem),
        # h and c are updated in place (no fresh HBM buffers per step).
        input_output_aliases={1: 1, 2: 2},
    )(ids_p, h0, c0, kparams["emb"], kparams["w_cat"], kparams["b"],
      kparams["w_fc"], kparams["b_fc"])

    out = out_p[:B, :out_size]
    hn = hn_p[:B, :H].reshape(1, B, H)
    cn = cn_p[:B, :H].reshape(1, B, H)
    return out, hn, cn


# ---------------------------------------------------------------------------
# Pure-JAX reference (mirrors the PyTorch module exactly)
# ---------------------------------------------------------------------------
def decoder_reference(raw, input_data, ht, ct):
    hi = jax.lax.Precision.HIGHEST
    x = jnp.take(raw["emb"], input_data, axis=0)                       # (B, E)
    h0, c0 = ht[0], ct[0]
    gates = (jnp.dot(x, raw["w_ih"].T, precision=hi) + raw["b_ih"]
             + jnp.dot(h0, raw["w_hh"].T, precision=hi) + raw["b_hh"])
    H = h0.shape[-1]
    i_g = jax.nn.sigmoid(gates[:, 0 * H:1 * H])
    f_g = jax.nn.sigmoid(gates[:, 1 * H:2 * H])
    g_g = jnp.tanh(gates[:, 2 * H:3 * H])
    o_g = jax.nn.sigmoid(gates[:, 3 * H:4 * H])
    c1 = f_g * c0 + i_g * g_g
    h1 = o_g * jnp.tanh(c1)
    out = jnp.dot(h1, raw["w_fc"].T, precision=hi) + raw["b_fc"]
    return out, h1[None], c1[None]


if __name__ == "__main__":
    # Small shapes consistent with the module
    input_size = 16       # decoder input vocab
    embedding_size = 32
    hidden_size = 32
    output_size = 16      # decoder output vocab
    batch = 2

    key = jax.random.PRNGKey(0)
    k_param, k_tok, k_h, k_c = jax.random.split(key, 4)

    raw_params = make_decoder_params(k_param, input_size, embedding_size,
                                     hidden_size, output_size)
    kparams = prepare_decoder_params(raw_params)

    input_data = jax.random.randint(k_tok, (batch,), 0, input_size, jnp.int32)
    ht = jax.random.normal(k_h, (1, batch, hidden_size), jnp.float32)
    ct = jax.random.normal(k_c, (1, batch, hidden_size), jnp.float32)

    out, h_new, c_new = decoder_forward(kparams, input_data, ht, ct,
                                        out_size=output_size)
    jax.block_until_ready((out, h_new, c_new))

    assert out.shape == (batch, output_size)
    assert h_new.shape == (1, batch, hidden_size)
    assert c_new.shape == (1, batch, hidden_size)

    # Numerical check against the pure-JAX reference of the PyTorch forward.
    ref_out, ref_h, ref_c = decoder_reference(raw_params, input_data, ht, ct)
    np.testing.assert_allclose(np.asarray(out), np.asarray(ref_out), rtol=1e-4, atol=1e-4)
    np.testing.assert_allclose(np.asarray(h_new), np.asarray(ref_h), rtol=1e-4, atol=1e-4)
    np.testing.assert_allclose(np.asarray(c_new), np.asarray(ref_c), rtol=1e-4, atol=1e-4)

    print("KERNEL_OK")
</pallas_src>

<mosaic_0001>
module attributes {stable_mosaic.version = 11 : i64} {
  func.func @decoder_kernel(%arg0: memref<8x1xi32, #tpu.memory_space<vmem>>, %arg1: memref<8x128xf32, #tpu.memory_space<vmem>>, %arg2: memref<8x128xf32, #tpu.memory_space<vmem>>, %arg3: memref<128x128xf32, #tpu.memory_space<vmem>>, %arg4: memref<256x512xf32, #tpu.memory_space<vmem>>, %arg5: memref<1x512xf32, #tpu.memory_space<vmem>>, %arg6: memref<128x128xf32, #tpu.memory_space<vmem>>, %arg7: memref<1x128xf32, #tpu.memory_space<vmem>>, %arg8: memref<8x128xf32, #tpu.memory_space<vmem>>, %arg9: memref<8x128xf32, #tpu.memory_space<vmem>>, %arg10: memref<8x128xf32, #tpu.memory_space<vmem>>) attributes {dimension_semantics = [], scalar_prefetch = 0 : i64, scratch_operands = 0 : i64, tpu.core_type = #tpu.core_type<tc>} {
    %c0 = arith.constant 0 : index
    %c0_0 = arith.constant 0 : index
    %0 = vector.load %arg0[%c0, %c0_0] : memref<8x1xi32, #tpu.memory_space<vmem>>, vector<8x1xi32>
    %1 = tpu.iota {dimensions = array<i32: 1>} : vector<8x128xi32>
    %2 = vector.broadcast %0 : vector<8x1xi32> to vector<8x128xi32>
    %3 = arith.cmpi eq, %1, %2 : vector<8x128xi32>
    %4 = arith.extui %3 : vector<8x128xi1> to vector<8x128xi32>
    %5 = arith.sitofp %4 : vector<8x128xi32> to vector<8x128xf32>
    %c0_1 = arith.constant 0 : index
    %c0_2 = arith.constant 0 : index
    %6 = vector.load %arg3[%c0_1, %c0_2] : memref<128x128xf32, #tpu.memory_space<vmem>>, vector<128x128xf32>
    %cst = arith.constant dense<0.000000e+00> : vector<8x128xf32>
    %7 = tpu.matmul %5, %6, %cst {dimension_numbers = #tpu.dot_dimension_numbers<[1], [0], [0], [1], [0, 0, 1, 1], [], []>} : vector<8x128xf32>, vector<128x128xf32>, vector<8x128xf32> -> vector<8x128xf32>
    %c0_3 = arith.constant 0 : index
    %c0_4 = arith.constant 0 : index
    %8 = vector.load %arg1[%c0_3, %c0_4] : memref<8x128xf32, #tpu.memory_space<vmem>>, vector<8x128xf32>
    %c0_5 = arith.constant 0 : index
    %c0_6 = arith.constant 0 : index
    %9 = vector.load %arg2[%c0_5, %c0_6] : memref<8x128xf32, #tpu.memory_space<vmem>>, vector<8x128xf32>
    %10 = tpu.concatenate %7, %8 in 1 : vector<8x128xf32>, vector<8x128xf32> -> vector<8x256xf32>
    %c0_7 = arith.constant 0 : index
    %c0_8 = arith.constant 0 : index
    %11 = vector.load %arg4[%c0_7, %c0_8] : memref<256x512xf32, #tpu.memory_space<vmem>>, vector<256x512xf32>
    %cst_9 = arith.constant dense<0.000000e+00> : vector<8x512xf32>
    %12 = tpu.matmul %10, %11, %cst_9 {dimension_numbers = #tpu.dot_dimension_numbers<[1], [0], [0], [1], [0, 0, 1, 1], [], []>} : vector<8x256xf32>, vector<256x512xf32>, vector<8x512xf32> -> vector<8x512xf32>
    %c0_10 = arith.constant 0 : index
    %c0_11 = arith.constant 0 : index
    %13 = vector.load %arg5[%c0_10, %c0_11] : memref<1x512xf32, #tpu.memory_space<vmem>>, vector<1x512xf32>
    %14 = vector.broadcast %13 : vector<1x512xf32> to vector<8x512xf32>
    %15 = arith.addf %12, %14 : vector<8x512xf32>
    %16 = vector.extract_strided_slice %15 {offsets = [0, 0], sizes = [8, 128], strides = [1, 1]} : vector<8x512xf32> to vector<8x128xf32>
    %17 = arith.negf %16 : vector<8x128xf32>
    %18 = math.exp %17 : vector<8x128xf32>
    %cst_12 = arith.constant 1.000000e+00 : f32
    %19 = vector.broadcast %cst_12 : f32 to vector<8x128xf32>
    %20 = arith.addf %19, %18 : vector<8x128xf32>
    %21 = arith.divf %19, %20 : vector<8x128xf32>
    %22 = vector.extract_strided_slice %15 {offsets = [0, 128], sizes = [8, 128], strides = [1, 1]} : vector<8x512xf32> to vector<8x128xf32>
    %23 = arith.negf %22 : vector<8x128xf32>
    %24 = math.exp %23 : vector<8x128xf32>
    %cst_13 = arith.constant 1.000000e+00 : f32
    %25 = vector.broadcast %cst_13 : f32 to vector<8x128xf32>
    %26 = arith.addf %25, %24 : vector<8x128xf32>
    %27 = arith.divf %25, %26 : vector<8x128xf32>
    %28 = vector.extract_strided_slice %15 {offsets = [0, 256], sizes = [8, 128], strides = [1, 1]} : vector<8x512xf32> to vector<8x128xf32>
    %29 = math.tanh %28 : vector<8x128xf32>
    %30 = vector.extract_strided_slice %15 {offsets = [0, 384], sizes = [8, 128], strides = [1, 1]} : vector<8x512xf32> to vector<8x128xf32>
    %31 = arith.negf %30 : vector<8x128xf32>
    %32 = math.exp %31 : vector<8x128xf32>
    %cst_14 = arith.constant 1.000000e+00 : f32
    %33 = vector.broadcast %cst_14 : f32 to vector<8x128xf32>
    %34 = arith.addf %33, %32 : vector<8x128xf32>
    %35 = arith.divf %33, %34 : vector<8x128xf32>
    %36 = arith.mulf %27, %9 : vector<8x128xf32>
    %37 = arith.mulf %21, %29 : vector<8x128xf32>
    %38 = arith.addf %36, %37 : vector<8x128xf32>
    %39 = math.tanh %38 : vector<8x128xf32>
    %40 = arith.mulf %35, %39 : vector<8x128xf32>
    %c0_15 = arith.constant 0 : index
    %c0_16 = arith.constant 0 : index
    %41 = vector.load %arg10[%c0_15, %c0_16] : memref<8x128xf32, #tpu.memory_space<vmem>>, vector<8x128xf32>
    tpu.vector_store %arg10[%c0_15, %c0_16], %38 {strides = array<i32>} : memref<8x128xf32, #tpu.memory_space<vmem>>, vector<8x128xf32>,
    %c0_17 = arith.constant 0 : index
    %c0_18 = arith.constant 0 : index
    %42 = vector.load %arg9[%c0_17, %c0_18] : memref<8x128xf32, #tpu.memory_space<vmem>>, vector<8x128xf32>
    tpu.vector_store %arg9[%c0_17, %c0_18], %40 {strides = array<i32>} : memref<8x128xf32, #tpu.memory_space<vmem>>, vector<8x128xf32>,
    %c0_19 = arith.constant 0 : index
    %c0_20 = arith.constant 0 : index
    %43 = vector.load %arg6[%c0_19, %c0_20] : memref<128x128xf32, #tpu.memory_space<vmem>>, vector<128x128xf32>
    %cst_21 = arith.constant dense<0.000000e+00> : vector<8x128xf32>
    %44 = tpu.matmul %40, %43, %cst_21 {dimension_numbers = #tpu.dot_dimension_numbers<[1], [0], [0], [1], [0, 0, 1, 1], [], []>} : vector<8x128xf32>, vector<128x128xf32>, vector<8x128xf32> -> vector<8x128xf32>
    %c0_22 = arith.constant 0 : index
    %c0_23 = arith.constant 0 : index
    %45 = vector.load %arg7[%c0_22, %c0_23] : memref<1x128xf32, #tpu.memory_space<vmem>>, vector<1x128xf32>
    %46 = vector.broadcast %45 : vector<1x128xf32> to vector<8x128xf32>
    %47 = arith.addf %44, %46 : vector<8x128xf32>
    %c0_24 = arith.constant 0 : index
    %c0_25 = arith.constant 0 : index
    %48 = vector.load %arg8[%c0_24, %c0_25] : memref<8x128xf32, #tpu.memory_space<vmem>>, vector<8x128xf32>
    tpu.vector_store %arg8[%c0_24, %c0_25], %47 {strides = array<i32>} : memref<8x128xf32, #tpu.memory_space<vmem>>, vector<8x128xf32>,
    return
  }
}

</mosaic_0001>

<llo_original>
// kernel: decoder_forward.1
$region0: #{decoder_forward.1}
  #allocation0 [shape = 'u32[]', space=smem, size = 0x4, offset = 0x4, fixed_abs, tag = 'smem constant byte address 0x4 - core index']
  #allocation1 [shape = 'u32[72,128]{1,0:T(1,128)}', space=vmem, size = 0x9000, scoped, tag = 'internal scratch']
  %s0 = inlined_call_operand.vmem [shape: s32[8,1], index: 0, kind: input, shape index: {}]
  %s1 = inlined_call_operand.vmem [shape: f32[8,128], index: 1, kind: input, shape index: {}, may-alias: {1,9}]
  %s2 = inlined_call_operand.vmem [shape: f32[8,128], index: 2, kind: input, shape index: {}, may-alias: {2,10}]
  %s3 = inlined_call_operand.hbm [shape: f32[128,128], index: 3, kind: input, shape index: {}]
  %s4 = inlined_call_operand.hbm [shape: f32[256,512], index: 4, kind: input, shape index: {}]
  %s5 = inlined_call_operand.vmem [shape: f32[1,512], index: 5, kind: input, shape index: {}]
  %s6 = inlined_call_operand.hbm [shape: f32[128,128], index: 6, kind: input, shape index: {}]
  %s7 = inlined_call_operand.vmem [shape: f32[1,128], index: 7, kind: input, shape index: {}]
  %s8 = inlined_call_operand.vmem [shape: f32[8,128], index: 8, kind: output, shape index: {0}]
  %s9 = inlined_call_operand.vmem [shape: f32[8,128], index: 9, kind: output, shape index: {1}, may-alias: {1,9}]
  %s10 = inlined_call_operand.vmem [shape: f32[8,128], index: 10, kind: output, shape index: {2}, may-alias: {2,10}]
  %11 = xla_tuple %s8, %s9, %s10
  %s12 = sld [smem:[#allocation0]]
  $region70: #{decoder_forward.1} parent=0
    _
  %s14 = ssub.s32 1, %s12
  %s15 = scalar_select 0, %s14, %s12
  $region1: #{decoder_forward.1} parent=0
    #allocation2 [shape = 'u8[65536]{0}', space=vmem, size = 0x10000, scoped, tag = 'input window, operand 3, single buffered']
    #allocation3 [shape = 's32[1]{0}', space=sflag, size = 0x4, scoped, tag = 'scoped memory for decoder_forward.1']
    #allocation4 [shape = 'u8[524288]{0}', space=vmem, size = 0x80000, scoped, tag = 'input window, operand 4, single buffered']
    #allocation5 [shape = 's32[1]{0}', space=sflag, size = 0x4, scoped, tag = 'scoped memory for decoder_forward.1']
    #allocation6 [shape = 'u8[65536]{0}', space=vmem, size = 0x10000, scoped, tag = 'input window, operand 6, single buffered']
    %16 = vsyncpa [#allocation3], 0
    %17 = vsyncpa [#allocation5], 0
    // Predicated region
    $region2: #{decoder_forward.1} parent=1 // pred_check
      _
    $region3: #{decoder_forward.1} parent=1 // pred_check_branch
      %19 = sbr.rel (0) target = $region5
    $region4: #{decoder_forward.1} parent=1 // pred_region
      _
    $region5: #{decoder_forward.1} parent=1 // pred_fallthru
      _
    // Predicated region
    $region6: #{decoder_forward.1} parent=1 // pred_check
      _
    $region7: #{decoder_forward.1} parent=1 // pred_check_branch
      %21 = sbr.rel (0) target = $region9
    $region8: #{decoder_forward.1} parent=1 // pred_region
      _
    $region9: #{decoder_forward.1} parent=1 // pred_fallthru
      _
    // Predicated region
    $region10: #{decoder_forward.1} parent=1 // pred_check
      _
    $region11: #{decoder_forward.1} parent=1 // pred_check_branch
      %23 = sbr.rel (0) target = $region13
    $region12: #{decoder_forward.1} parent=1 // pred_region
      _
    $region13: #{decoder_forward.1} parent=1 // pred_fallthru
      _
    // Predicated region
    $region14: #{decoder_forward.1} parent=1 // pred_check
      _
    $region15: #{decoder_forward.1} parent=1 // pred_check_branch
      %25 = sbr.rel (0) target = $region17
    $region16: #{decoder_forward.1} parent=1 // pred_region
      %27 = vsyncadd [#allocation3], 0
      %s28 = sshll.u32 %s3, 4
      %s29 = int_to_ptr.hbm [resolvable:$true] %s28
      %s30 = sshll.u32 [#allocation2], 4
      %s31 = int_to_ptr.vmem [resolvable:$true] %s30
      %36 = dma.hbm_to_vmem [thread:$0]  %s29, 2048, %s31, [#allocation3], 128, 128, 8
    $region17: #{decoder_forward.1} parent=1 // pred_fallthru
      _
    // Predicated region
    $region18: #{decoder_forward.1} parent=1 // pred_check
      _
    $region19: #{decoder_forward.1} parent=1 // pred_check_branch
      %38 = sbr.rel (0) target = $region21
    $region20: #{decoder_forward.1} parent=1 // pred_region
      %40 = vsyncadd [#allocation5], 0
      %s41 = sshll.u32 %s4, 4
      %s42 = int_to_ptr.hbm [resolvable:$true] %s41
      %s43 = sshll.u32 [#allocation4], 4
      %s44 = int_to_ptr.vmem [resolvable:$true] %s43
      %49 = dma.hbm_to_vmem [thread:$0]  %s42, 16384, %s44, [#allocation5], 512, 512, 32
    $region21: #{decoder_forward.1} parent=1 // pred_fallthru
      _
    // Predicated region
    $region22: #{decoder_forward.1} parent=1 // pred_check
      _
    $region23: #{decoder_forward.1} parent=1 // pred_check_branch
      %51 = sbr.rel (0) target = $region25
    $region24: #{decoder_forward.1} parent=1 // pred_region
      _
    $region25: #{decoder_forward.1} parent=1 // pred_fallthru
      _
    // Predicated region
    $region26: #{decoder_forward.1} parent=1 // pred_check
      _
    $region27: #{decoder_forward.1} parent=1 // pred_check_branch
      %53 = sbr.rel (0) target = $region29
    $region28: #{decoder_forward.1} parent=1 // pred_region
      %55 = vsyncadd [#allocation5], 0
      %s56 = sshll.u32 %s6, 4
      %s57 = int_to_ptr.hbm [resolvable:$true] %s56
      %s58 = sshll.u32 [#allocation6], 4
      %s59 = int_to_ptr.vmem [resolvable:$true] %s58
      %64 = dma.hbm_to_vmem [thread:$0]  %s57, 2048, %s59, [#allocation5], 128, 128, 8
    $region29: #{decoder_forward.1} parent=1 // pred_fallthru
      _
    // Predicated region
    $region30: #{decoder_forward.1} parent=1 // pred_check
      _
    $region31: #{decoder_forward.1} parent=1 // pred_check_branch
      %66 = sbr.rel (0) target = $region33
    $region32: #{decoder_forward.1} parent=1 // pred_region
      _
    $region33: #{decoder_forward.1} parent=1 // pred_fallthru
      _
    // Predicated region
    $region34: #{decoder_forward.1} parent=1 // pred_check
      _
    $region35: #{decoder_forward.1} parent=1 // pred_check_branch
      %68 = sbr.rel (0) target = $region37
    $region36: #{decoder_forward.1} parent=1 // pred_region
      %70 = dma.done [#allocation3], 2048
    $region37: #{decoder_forward.1} parent=1 // pred_fallthru
      _
    // Predicated region
    $region38: #{decoder_forward.1} parent=1 // pred_check
      _
    $region39: #{decoder_forward.1} parent=1 // pred_check_branch
      %72 = sbr.rel (0) target = $region41
    $region40: #{decoder_forward.1} parent=1 // pred_region
      %74 = dma.done [#allocation5], 16384
    $region41: #{decoder_forward.1} parent=1 // pred_fallthru
      _
    // Predicated region
    $region42: #{decoder_forward.1} parent=1 // pred_check
      _
    $region43: #{decoder_forward.1} parent=1 // pred_check_branch
      %76 = sbr.rel (0) target = $region45
    $region44: #{decoder_forward.1} parent=1 // pred_region
      %78 = dma.done [#allocation5], 2048
    $region45: #{decoder_forward.1} parent=1 // pred_fallthru
      _
    %v79 = vld [vmem:[%s0] sm:$0xff]
    %v80 = vlaneseq
    %v81 = vand.u32 %v80, 127
    %82 = vset.pattern.permute.xlu0 0
    %83 = vperm.xlu0 %82, %v79
    %v84 = vpop.permute.xlu0 %83
    %vm85 = vcmp.eq.s32.totalorder %v81, %v84
    %v86 = vsel %vm85, 1, 0
    %v87 = vcvt.s32.f32 %v86
    %v88 = vld [vmem:[#allocation2] sm:$0xff]
    %v89 = vld [vmem:[#allocation2 + $0x8] sm:$0xff]
    %v90 = vld [vmem:[#allocation2 + $0x10] sm:$0xff]
    %v91 = vld [vmem:[#allocation2 + $0x18] sm:$0xff]
    %v92 = vld [vmem:[#allocation2 + $0x20] sm:$0xff]
    %v93 = vld [vmem:[#allocation2 + $0x28] sm:$0xff]
    %v94 = vld [vmem:[#allocation2 + $0x30] sm:$0xff]
    %v95 = vld [vmem:[#allocation2 + $0x38] sm:$0xff]
    %v96 = vld [vmem:[#allocation2 + $0x40] sm:$0xff]
    %v97 = vld [vmem:[#allocation2 + $0x48] sm:$0xff]
    %v98 = vld [vmem:[#allocation2 + $0x50] sm:$0xff]
    %v99 = vld [vmem:[#allocation2 + $0x58] sm:$0xff]
    %v100 = vld [vmem:[#allocation2 + $0x60] sm:$0xff]
    %v101 = vld [vmem:[#allocation2 + $0x68] sm:$0xff]
    %v102 = vld [vmem:[#allocation2 + $0x70] sm:$0xff]
    %v103 = vld [vmem:[#allocation2 + $0x78] sm:$0xff]
    %104 = vmatpush.msra.mxu0 %v103
    %105 = vmatpush.msra.mxu0 %v102
    %106 = vmatpush.msra.mxu0 %v101
    %107 = vmatpush.msra.mxu0 %v100
    %108 = vmatpush.msra.mxu0 %v99
    %109 = vmatpush.msra.mxu0 %v98
    %110 = vmatpush.msra.mxu0 %v97
    %111 = vmatpush.msra.mxu0 %v96
    %112 = vmatpush.msra.mxu0 %v95
    %113 = vmatpush.msra.mxu0 %v94
    %114 = vmatpush.msra.mxu0 %v93
    %115 = vmatpush.msra.mxu0 %v92
    %116 = vmatpush.msra.mxu0 %v91
    %117 = vmatpush.msra.mxu0 %v90
    %118 = vmatpush.msra.mxu0 %v89
    %119 = vmatpush.msra.mxu0 %v88
    %120 = vmatmul.f32.gmra.mxu0 %v87
    %v121 = vpop.f32.mrf.mxu0
    %v122 = vadd.f32 0.0, %v121
    %123 = vdwg.mxu0
    %v124 = vld [vmem:[%s1] sm:$0xff]
    %v125 = vld [vmem:[%s2] sm:$0xff]
    %v126 = vld [vmem:[#allocation4] sm:$0xff]
    %v127 = vld [vmem:[#allocation4 + $0x8] sm:$0xff]
    %v128 = vld [vmem:[#allocation4 + $0x10] sm:$0xff]
    %v129 = vld [vmem:[#allocation4 + $0x18] sm:$0xff]
    %v130 = vld [vmem:[#allocation4 + $0x20] sm:$0xff]
    %v131 = vld [vmem:[#allocation4 + $0x28] sm:$0xff]
    %v132 = vld [vmem:[#allocation4 + $0x30] sm:$0xff]
    %v133 = vld [vmem:[#allocation4 + $0x38] sm:$0xff]
    %v134 = vld [vmem:[#allocation4 + $0x40] sm:$0xff]
    %v135 = vld [vmem:[#allocation4 + $0x48] sm:$0xff]
    %v136 = vld [vmem:[#allocation4 + $0x50] sm:$0xff]
    %v137 = vld [vmem:[#allocation4 + $0x58] sm:$0xff]
    %v138 = vld [vmem:[#allocation4 + $0x60] sm:$0xff]
    %v139 = vld [vmem:[#allocation4 + $0x68] sm:$0xff]
    %v140 = vld [vmem:[#allocation4 + $0x70] sm:$0xff]
    %v141 = vld [vmem:[#allocation4 + $0x78] sm:$0xff]
    %v142 = vld [vmem:[#allocation4 + $0x80] sm:$0xff]
    %v143 = vld [vmem:[#allocation4 + $0x88] sm:$0xff]
    %v144 = vld [vmem:[#allocation4 + $0x90] sm:$0xff]
    %v145 = vld [vmem:[#allocation4 + $0x98] sm:$0xff]
    %v146 = vld [vmem:[#allocation4 + $0xa0] sm:$0xff]
    %v147 = vld [vmem:[#allocation4 + $0xa8] sm:$0xff]
    %v148 = vld [vmem:[#allocation4 + $0xb0] sm:$0xff]
    %v149 = vld [vmem:[#allocation4 + $0xb8] sm:$0xff]
    %v150 = vld [vmem:[#allocation4 + $0xc0] sm:$0xff]
    %v151 = vld [vmem:[#allocation4 + $0xc8] sm:$0xff]
    %v152 = vld [vmem:[#allocation4 + $0xd0] sm:$0xff]
    %v153 = vld [vmem:[#allocation4 + $0xd8] sm:$0xff]
    %v154 = vld [vmem:[#allocation4 + $0xe0] sm:$0xff]
    %v155 = vld [vmem:[#allocation4 + $0xe8] sm:$0xff]
    %v156 = vld [vmem:[#allocation4 + $0xf0] sm:$0xff]
    %v157 = vld [vmem:[#allocation4 + $0xf8] sm:$0xff]
    %v158 = vld [vmem:[#allocation4 + $0x100] sm:$0xff]
    %v159 = vld [vmem:[#allocation4 + $0x108] sm:$0xff]
    %v160 = vld [vmem:[#allocation4 + $0x110] sm:$0xff]
    %v161 = vld [vmem:[#allocation4 + $0x118] sm:$0xff]
    %v162 = vld [vmem:[#allocation4 + $0x120] sm:$0xff]
    %v163 = vld [vmem:[#allocation4 + $0x128] sm:$0xff]
    %v164 = vld [vmem:[#allocation4 + $0x130] sm:$0xff]
    %v165 = vld [vmem:[#allocation4 + $0x138] sm:$0xff]
    %v166 = vld [vmem:[#allocation4 + $0x140] sm:$0xff]
    %v167 = vld [vmem:[#allocation4 + $0x148] sm:$0xff]
    %v168 = vld [vmem:[#allocation4 + $0x150] sm:$0xff]
    %v169 = vld [vmem:[#allocation4 + $0x158] sm:$0xff]
    %v170 = vld [vmem:[#allocation4 + $0x160] sm:$0xff]
    %v171 = vld [vmem:[#allocation4 + $0x168] sm:$0xff]
    %v172 = vld [vmem:[#allocation4 + $0x170] sm:$0xff]
    %v173 = vld [vmem:[#allocation4 + $0x178] sm:$0xff]
    %v174 = vld [vmem:[#allocation4 + $0x180] sm:$0xff]
    %v175 = vld [vmem:[#allocation4 + $0x188] sm:$0xff]
    %v176 = vld [vmem:[#allocation4 + $0x190] sm:$0xff]
    %v177 = vld [vmem:[#allocation4 + $0x198] sm:$0xff]
    %v178 = vld [vmem:[#allocation4 + $0x1a0] sm:$0xff]
    %v179 = vld [vmem:[#allocation4 + $0x1a8] sm:$0xff]
    %v180 = vld [vmem:[#allocation4 + $0x1b0] sm:$0xff]
    %v181 = vld [vmem:[#allocation4 + $0x1b8] sm:$0xff]
    %v182 = vld [vmem:[#allocation4 + $0x1c0] sm:$0xff]
    %v183 = vld [vmem:[#allocation4 + $0x1c8] sm:$0xff]
    %v184 = vld [vmem:[#allocation4 + $0x1d0] sm:$0xff]
    %v185 = vld [vmem:[#allocation4 + $0x1d8] sm:$0xff]
    %v186 = vld [vmem:[#allocation4 + $0x1e0] sm:$0xff]
    %v187 = vld [vmem:[#allocation4 + $0x1e8] sm:$0xff]
    %v188 = vld [vmem:[#allocation4 + $0x1f0] sm:$0xff]
    %v189 = vld [vmem:[#allocation4 + $0x1f8] sm:$0xff]
    %v190 = vld [vmem:[#allocation4 + $0x200] sm:$0xff]
    %v191 = vld [vmem:[#allocation4 + $0x208] sm:$0xff]
    %v192 = vld [vmem:[#allocation4 + $0x210] sm:$0xff]
    %v193 = vld [vmem:[#allocation4 + $0x218] sm:$0xff]
    %v194 = vld [vmem:[#allocation4 + $0x220] sm:$0xff]
    %v195 = vld [vmem:[#allocation4 + $0x228] sm:$0xff]
    %v196 = vld [vmem:[#allocation4 + $0x230] sm:$0xff]
    %v197 = vld [vmem:[#allocation4 + $0x238] sm:$0xff]
    %v198 = vld [vmem:[#allocation4 + $0x240] sm:$0xff]
    %v199 = vld [vmem:[#allocation4 + $0x248] sm:$0xff]
    %v200 = vld [vmem:[#allocation4 + $0x250] sm:$0xff]
    %v201 = vld [vmem:[#allocation4 + $0x258] sm:$0xff]
    %v202 = vld [vmem:[#allocation4 + $0x260] sm:$0xff]
    %v203 = vld [vmem:[#allocation4 + $0x268] sm:$0xff]
    %v204 = vld [vmem:[#allocation4 + $0x270] sm:$0xff]
    %v205 = vld [vmem:[#allocation4 + $0x278] sm:$0xff]
    %v206 = vld [vmem:[#allocation4 + $0x280] sm:$0xff]
    %v207 = vld [vmem:[#allocation4 + $0x288] sm:$0xff]
    %v208 = vld [vmem:[#allocation4 + $0x290] sm:$0xff]
    %v209 = vld [vmem:[#allocation4 + $0x298] sm:$0xff]
    %v210 = vld [vmem:[#allocation4 + $0x2a0] sm:$0xff]
    %v211 = vld [vmem:[#allocation4 + $0x2a8] sm:$0xff]
    %v212 = vld [vmem:[#allocation4 + $0x2b0] sm:$0xff]
    %v213 = vld [vmem:[#allocation4 + $0x2b8] sm:$0xff]
    %v214 = vld [vmem:[#allocation4 + $0x2c0] sm:$0xff]
    %v215 = vld [vmem:[#allocation4 + $0x2c8] sm:$0xff]
    %v216 = vld [vmem:[#allocation4 + $0x2d0] sm:$0xff]
    %v217 = vld [vmem:[#allocation4 + $0x2d8] sm:$0xff]
    %v218 = vld [vmem:[#allocation4 + $0x2e0] sm:$0xff]
    %v219 = vld [vmem:[#allocation4 + $0x2e8] sm:$0xff]
    %v220 = vld [vmem:[#allocation4 + $0x2f0] sm:$0xff]
    %v221 = vld [vmem:[#allocation4 + $0x2f8] sm:$0xff]
    %v222 = vld [vmem:[#allocation4 + $0x300] sm:$0xff]
    %v223 = vld [vmem:[#allocation4 + $0x308] sm:$0xff]
    %v224 = vld [vmem:[#allocation4 + $0x310] sm:$0xff]
    %v225 = vld [vmem:[#allocation4 + $0x318] sm:$0xff]
    %v226 = vld [vmem:[#allocation4 + $0x320] sm:$0xff]
    %v227 = vld [vmem:[#allocation4 + $0x328] sm:$0xff]
    %v228 = vld [vmem:[#allocation4 + $0x330] sm:$0xff]
    %v229 = vld [vmem:[#allocation4 + $0x338] sm:$0xff]
    %v230 = vld [vmem:[#allocation4 + $0x340] sm:$0xff]
    %v231 = vld [vmem:[#allocation4 + $0x348] sm:$0xff]
    %v232 = vld [vmem:[#allocation4 + $0x350] sm:$0xff]
    %v233 = vld [vmem:[#allocation4 + $0x358] sm:$0xff]
    %v234 = vld [vmem:[#allocation4 + $0x360] sm:$0xff]
    %v235 = vld [vmem:[#allocation4 + $0x368] sm:$0xff]
    %v236 = vld [vmem:[#allocation4 + $0x370] sm:$0xff]
    %v237 = vld [vmem:[#allocation4 + $0x378] sm:$0xff]
    %v238 = vld [vmem:[#allocation4 + $0x380] sm:$0xff]
    %v239 = vld [vmem:[#allocation4 + $0x388] sm:$0xff]
    %v240 = vld [vmem:[#allocation4 + $0x390] sm:$0xff]
    %v241 = vld [vmem:[#allocation4 + $0x398] sm:$0xff]
    %v242 = vld [vmem:[#allocation4 + $0x3a0] sm:$0xff]
    %v243 = vld [vmem:[#allocation4 + $0x3a8] sm:$0xff]
    %v244 = vld [vmem:[#allocation4 + $0x3b0] sm:$0xff]
    %v245 = vld [vmem:[#allocation4 + $0x3b8] sm:$0xff]
    %v246 = vld [vmem:[#allocation4 + $0x3c0] sm:$0xff]
    %v247 = vld [vmem:[#allocation4 + $0x3c8] sm:$0xff]
    %v248 = vld [vmem:[#allocation4 + $0x3d0] sm:$0xff]
    %v249 = vld [vmem:[#allocation4 + $0x3d8] sm:$0xff]
    %v250 = vld [vmem:[#allocation4 + $0x3e0] sm:$0xff]
    %v251 = vld [vmem:[#allocation4 + $0x3e8] sm:$0xff]
    %v252 = vld [vmem:[#allocation4 + $0x3f0] sm:$0xff]
    %v253 = vld [vmem:[#allocation4 + $0x3f8] sm:$0xff]
    %v254 = vld [vmem:[%s5] sm:$0xf]
    %v256 = vperm.slane %v254, 0
    %v257 = vperm.slane %v254, 1
    %v258 = vperm.slane %v254, 2
    %v259 = vperm.slane %v254, 3
    %264 = vmatpush.msra.mxu0 %v186
    %265 = vmatpush.msra.mxu0 %v182
    %266 = vmatpush.msra.mxu0 %v178
    %267 = vmatpush.msra.mxu0 %v174
    %268 = vmatpush.msra.mxu0 %v170
    %269 = vmatpush.msra.mxu0 %v166
    %270 = vmatpush.msra.mxu0 %v162
    %271 = vmatpush.msra.mxu0 %v158
    %272 = vmatpush.msra.mxu0 %v154
    %273 = vmatpush.msra.mxu0 %v150
    %274 = vmatpush.msra.mxu0 %v146
    %275 = vmatpush.msra.mxu0 %v142
    %276 = vmatpush.msra.mxu0 %v138
    %277 = vmatpush.msra.mxu0 %v134
    %278 = vmatpush.msra.mxu0 %v130
    %279 = vmatpush.msra.mxu0 %v126
    %280 = vmatmul.f32.gmra.mxu0 %v122
    %v281 = vpop.f32.mrf.mxu0
    %v282 = vadd.f32 %v256, %v281
    %283 = vdwg.mxu0
    %284 = vmatpush.msra.mxu0 %v250
    %285 = vmatpush.msra.mxu0 %v246
    %286 = vmatpush.msra.mxu0 %v242
    %287 = vmatpush.msra.mxu0 %v238
    %288 = vmatpush.msra.mxu0 %v234
    %289 = vmatpush.msra.mxu0 %v230
    %290 = vmatpush.msra.mxu0 %v226
    %291 = vmatpush.msra.mxu0 %v222
    %292 = vmatpush.msra.mxu0 %v218
    %293 = vmatpush.msra.mxu0 %v214
    %294 = vmatpush.msra.mxu0 %v210
    %295 = vmatpush.msra.mxu0 %v206
    %296 = vmatpush.msra.mxu0 %v202
    %297 = vmatpush.msra.mxu0 %v198
    %298 = vmatpush.msra.mxu0 %v194
    %299 = vmatpush.msra.mxu0 %v190
    %300 = vmatmul.f32.gmra.mxu0 %v124
    %v301 = vpop.f32.mrf.mxu0
    %v302 = vadd.f32 %v282, %v301
    %303 = vdwg.mxu0
    %304 = vmatpush.msra.mxu0 %v187
    %305 = vmatpush.msra.mxu0 %v183
    %306 = vmatpush.msra.mxu0 %v179
    %307 = vmatpush.msra.mxu0 %v175
    %308 = vmatpush.msra.mxu0 %v171
    %309 = vmatpush.msra.mxu0 %v167
    %310 = vmatpush.msra.mxu0 %v163
    %311 = vmatpush.msra.mxu0 %v159
    %312 = vmatpush.msra.mxu0 %v155
    %313 = vmatpush.msra.mxu0 %v151
    %314 = vmatpush.msra.mxu0 %v147
    %315 = vmatpush.msra.mxu0 %v143
    %316 = vmatpush.msra.mxu0 %v139
    %317 = vmatpush.msra.mxu0 %v135
    %318 = vmatpush.msra.mxu0 %v131
    %319 = vmatpush.msra.mxu0 %v127
    %320 = vmatmul.f32.gmra.mxu0 %v122
    %v321 = vpop.f32.mrf.mxu0
    %v322 = vadd.f32 %v257, %v321
    %323 = vdwg.mxu0
    %324 = vmatpush.msra.mxu0 %v251
    %325 = vmatpush.msra.mxu0 %v247
    %326 = vmatpush.msra.mxu0 %v243
    %327 = vmatpush.msra.mxu0 %v239
    %328 = vmatpush.msra.mxu0 %v235
    %329 = vmatpush.msra.mxu0 %v231
    %330 = vmatpush.msra.mxu0 %v227
    %331 = vmatpush.msra.mxu0 %v223
    %332 = vmatpush.msra.mxu0 %v219
    %333 = vmatpush.msra.mxu0 %v215
    %334 = vmatpush.msra.mxu0 %v211
    %335 = vmatpush.msra.mxu0 %v207
    %336 = vmatpush.msra.mxu0 %v203
    %337 = vmatpush.msra.mxu0 %v199
    %338 = vmatpush.msra.mxu0 %v195
    %339 = vmatpush.msra.mxu0 %v191
    %340 = vmatmul.f32.gmra.mxu0 %v124
    %v341 = vpop.f32.mrf.mxu0
    %v342 = vadd.f32 %v322, %v341
    %343 = vdwg.mxu0
    %344 = vmatpush.msra.mxu0 %v188
    %345 = vmatpush.msra.mxu0 %v184
    %346 = vmatpush.msra.mxu0 %v180
    %347 = vmatpush.msra.mxu0 %v176
    %348 = vmatpush.msra.mxu0 %v172
    %349 = vmatpush.msra.mxu0 %v168
    %350 = vmatpush.msra.mxu0 %v164
    %351 = vmatpush.msra.mxu0 %v160
    %352 = vmatpush.msra.mxu0 %v156
    %353 = vmatpush.msra.mxu0 %v152
    %354 = vmatpush.msra.mxu0 %v148
    %355 = vmatpush.msra.mxu0 %v144
    %356 = vmatpush.msra.mxu0 %v140
    %357 = vmatpush.msra.mxu0 %v136
    %358 = vmatpush.msra.mxu0 %v132
    %359 = vmatpush.msra.mxu0 %v128
    %360 = vmatmul.f32.gmra.mxu0 %v122
    %v361 = vpop.f32.mrf.mxu0
    %v362 = vadd.f32 %v258, %v361
    %363 = vdwg.mxu0
    %364 = vmatpush.msra.mxu0 %v252
    %365 = vmatpush.msra.mxu0 %v248
    %366 = vmatpush.msra.mxu0 %v244
    %367 = vmatpush.msra.mxu0 %v240
    %368 = vmatpush.msra.mxu0 %v236
    %369 = vmatpush.msra.mxu0 %v232
    %370 = vmatpush.msra.mxu0 %v228
    %371 = vmatpush.msra.mxu0 %v224
    %372 = vmatpush.msra.mxu0 %v220
    %373 = vmatpush.msra.mxu0 %v216
    %374 = vmatpush.msra.mxu0 %v212
    %375 = vmatpush.msra.mxu0 %v208
    %376 = vmatpush.msra.mxu0 %v204
    %377 = vmatpush.msra.mxu0 %v200
    %378 = vmatpush.msra.mxu0 %v196
    %379 = vmatpush.msra.mxu0 %v192
    %380 = vmatmul.f32.gmra.mxu0 %v124
    %v381 = vpop.f32.mrf.mxu0
    %v382 = vadd.f32 %v362, %v381
    %383 = vdwg.mxu0
    %384 = vmatpush.msra.mxu0 %v189
    %385 = vmatpush.msra.mxu0 %v185
    %386 = vmatpush.msra.mxu0 %v181
    %387 = vmatpush.msra.mxu0 %v177
    %388 = vmatpush.msra.mxu0 %v173
    %389 = vmatpush.msra.mxu0 %v169
    %390 = vmatpush.msra.mxu0 %v165
    %391 = vmatpush.msra.mxu0 %v161
    %392 = vmatpush.msra.mxu0 %v157
    %393 = vmatpush.msra.mxu0 %v153
    %394 = vmatpush.msra.mxu0 %v149
    %395 = vmatpush.msra.mxu0 %v145
    %396 = vmatpush.msra.mxu0 %v141
    %397 = vmatpush.msra.mxu0 %v137
    %398 = vmatpush.msra.mxu0 %v133
    %399 = vmatpush.msra.mxu0 %v129
    %400 = vmatmul.f32.gmra.mxu0 %v122
    %v401 = vpop.f32.mrf.mxu0
    %v402 = vadd.f32 %v259, %v401
    %403 = vdwg.mxu0
    %404 = vmatpush.msra.mxu0 %v253
    %405 = vmatpush.msra.mxu0 %v249
    %406 = vmatpush.msra.mxu0 %v245
    %407 = vmatpush.msra.mxu0 %v241
    %408 = vmatpush.msra.mxu0 %v237
    %409 = vmatpush.msra.mxu0 %v233
    %410 = vmatpush.msra.mxu0 %v229
    %411 = vmatpush.msra.mxu0 %v225
    %412 = vmatpush.msra.mxu0 %v221
    %413 = vmatpush.msra.mxu0 %v217
    %414 = vmatpush.msra.mxu0 %v213
    %415 = vmatpush.msra.mxu0 %v209
    %416 = vmatpush.msra.mxu0 %v205
    %417 = vmatpush.msra.mxu0 %v201
    %418 = vmatpush.msra.mxu0 %v197
    %419 = vmatpush.msra.mxu0 %v193
    %420 = vmatmul.f32.gmra.mxu0 %v124
    %v421 = vpop.f32.mrf.mxu0
    %v422 = vadd.f32 %v402, %v421
    %423 = vdwg.mxu0
    %v424 = vxor.u32 %v302, 2147483648
    %v425 = vmul.f32 %v424, 1.442695
    %v426 = vpow.pop %v425
    %v427 = vadd.f32 %v426, 1.0
    %v428 = vrcp.pop %v427
    %v429 = vmul.f32 %v427, %v428
    %v430 = vsub.f32 1.0, %v429
    %v431 = vmul.f32 %v428, %v430
    %v432 = vadd.f32 %v428, %v431
    %vm433 = vweird.f32 %v427
    %vm434 = vweird.f32 %v428
    %vm435 = vmor %vm433, %vm434
    %v436 = vsel %vm435, %v428, %v432
    %v437 = vand.u32 2147483647, %v427
    %vm438 = vcmp.eq.f32.partialorder %v437, 8.507059e+37
    %v439 = vand.u32 %v427, 2147483648
    %v440 = vor.u32 1.1754944e-38, %v439
    %v441 = vsel %vm438, %v440, %v436
    %v442 = vmul.f32 1.0, %v441
    %v443 = vxor.u32 %v342, 2147483648
    %v444 = vmul.f32 %v443, 1.442695
    %v445 = vpow.pop %v444
    %v446 = vadd.f32 %v445, 1.0
    %v447 = vrcp.pop %v446
    %v448 = vmul.f32 %v446, %v447
    %v449 = vsub.f32 1.0, %v448
    %v450 = vmul.f32 %v447, %v449
    %v451 = vadd.f32 %v447, %v450
    %vm452 = vweird.f32 %v446
    %vm453 = vweird.f32 %v447
    %vm454 = vmor %vm452, %vm453
    %v455 = vsel %vm454, %v447, %v451
    %v456 = vand.u32 2147483647, %v446
    %vm457 = vcmp.eq.f32.partialorder %v456, 8.507059e+37
    %v458 = vand.u32 %v446, 2147483648
    %v459 = vor.u32 1.1754944e-38, %v458
    %v460 = vsel %vm457, %v459, %v455
    %v461 = vmul.f32 1.0, %v460
    %v462 = vtanh.pop %v382
    %v463 = vxor.u32 %v422, 2147483648
    %v464 = vmul.f32 %v463, 1.442695
    %v465 = vpow.pop %v464
    %v466 = vadd.f32 %v465, 1.0
    %v467 = vrcp.pop %v466
    %v468 = vmul.f32 %v466, %v467
    %v469 = vsub.f32 1.0, %v468
    %v470 = vmul.f32 %v467, %v469
    %v471 = vadd.f32 %v467, %v470
    %vm472 = vweird.f32 %v466
    %vm473 = vweird.f32 %v467
    %vm474 = vmor %vm472, %vm473
    %v475 = vsel %vm474, %v467, %v471
    %v476 = vand.u32 2147483647, %v466
    %vm477 = vcmp.eq.f32.partialorder %v476, 8.507059e+37
    %v478 = vand.u32 %v466, 2147483648
    %v479 = vor.u32 1.1754944e-38, %v478
    %v480 = vsel %vm477, %v479, %v475
    %v481 = vmul.f32 1.0, %v480
    %v482 = vmul.f32 %v461, %v125
    %v483 = vmul.f32 %v442, %v462
    %v484 = vadd.f32 %v482, %v483
    %v485 = vtanh.pop %v484
    %v486 = vmul.f32 %v481, %v485
    %487 = vst [vmem:[%s10] sm:$0xff] %v484
    %488 = vst [vmem:[%s9] sm:$0xff] %v486
    %v489 = vld [vmem:[#allocation6] sm:$0xff]
    %v490 = vld [vmem:[#allocation6 + $0x8] sm:$0xff]
    %v491 = vld [vmem:[#allocation6 + $0x10] sm:$0xff]
    %v492 = vld [vmem:[#allocation6 + $0x18] sm:$0xff]
    %v493 = vld [vmem:[#allocation6 + $0x20] sm:$0xff]
    %v494 = vld [vmem:[#allocation6 + $0x28] sm:$0xff]
    %v495 = vld [vmem:[#allocation6 + $0x30] sm:$0xff]
    %v496 = vld [vmem:[#allocation6 + $0x38] sm:$0xff]
    %v497 = vld [vmem:[#allocation6 + $0x40] sm:$0xff]
    %v498 = vld [vmem:[#allocation6 + $0x48] sm:$0xff]
    %v499 = vld [vmem:[#allocation6 + $0x50] sm:$0xff]
    %v500 = vld [vmem:[#allocation6 + $0x58] sm:$0xff]
    %v501 = vld [vmem:[#allocation6 + $0x60] sm:$0xff]
    %v502 = vld [vmem:[#allocation6 + $0x68] sm:$0xff]
    %v503 = vld [vmem:[#allocation6 + $0x70] sm:$0xff]
    %v504 = vld [vmem:[#allocation6 + $0x78] sm:$0xff]
    %v505 = vld [vmem:[%s7] sm:$0x1]
    %v507 = vperm.slane %v505, 0
    %509 = vmatpush.msra.mxu0 %v504
    %510 = vmatpush.msra.mxu0 %v503
    %511 = vmatpush.msra.mxu0 %v502
    %512 = vmatpush.msra.mxu0 %v501
    %513 = vmatpush.msra.mxu0 %v500
    %514 = vmatpush.msra.mxu0 %v499
    %515 = vmatpush.msra.mxu0 %v498
    %516 = vmatpush.msra.mxu0 %v497
    %517 = vmatpush.msra.mxu0 %v496
    %518 = vmatpush.msra.mxu0 %v495
    %519 = vmatpush.msra.mxu0 %v494
    %520 = vmatpush.msra.mxu0 %v493
    %521 = vmatpush.msra.mxu0 %v492
    %522 = vmatpush.msra.mxu0 %v491
    %523 = vmatpush.msra.mxu0 %v490
    %524 = vmatpush.msra.mxu0 %v489
    %525 = vmatmul.f32.gmra.mxu0 %v486
    %v526 = vpop.f32.mrf.mxu0
    %v527 = vadd.f32 %v507, %v526
    %528 = vdwg.mxu0
    %529 = vst [vmem:[%s8] sm:$0xff] %v527
    // Predicated region
    $region46: #{decoder_forward.1} parent=1 // pred_check
      _
    $region47: #{decoder_forward.1} parent=1 // pred_check_branch
      %531 = sbr.rel (0) target = $region49
    $region48: #{decoder_forward.1} parent=1 // pred_region
      _
    $region49: #{decoder_forward.1} parent=1 // pred_fallthru
      _
    // Predicated region
    $region50: #{decoder_forward.1} parent=1 // pred_check
      _
    $region51: #{decoder_forward.1} parent=1 // pred_check_branch
      %533 = sbr.rel (0) target = $region53
    $region52: #{decoder_forward.1} parent=1 // pred_region
      _
    $region53: #{decoder_forward.1} parent=1 // pred_fallthru
      _
    // Predicated region
    $region54: #{decoder_forward.1} parent=1 // pred_check
      _
    $region55: #{decoder_forward.1} parent=1 // pred_check_branch
      %535 = sbr.rel (0) target = $region57
    $region56: #{decoder_forward.1} parent=1 // pred_region
      _
    $region57: #{decoder_forward.1} parent=1 // pred_fallthru
      _
    // Predicated region
    $region58: #{decoder_forward.1} parent=1 // pred_check
      _
    $region59: #{decoder_forward.1} parent=1 // pred_check_branch
      %537 = sbr.rel (0) target = $region61
    $region60: #{decoder_forward.1} parent=1 // pred_region
      _
    $region61: #{decoder_forward.1} parent=1 // pred_fallthru
      _
    // Predicated region
    $region62: #{decoder_forward.1} parent=1 // pred_check
      _
    $region63: #{decoder_forward.1} parent=1 // pred_check_branch
      %539 = sbr.rel (0) target = $region65
    $region64: #{decoder_forward.1} parent=1 // pred_region
      _
    $region65: #{decoder_forward.1} parent=1 // pred_fallthru
      _
    // Predicated region
    $region66: #{decoder_forward.1} parent=1 // pred_check
      _
    $region67: #{decoder_forward.1} parent=1 // pred_check_branch
      %541 = sbr.rel (0) target = $region69
    $region68: #{decoder_forward.1} parent=1 // pred_region
      _
    $region69: #{decoder_forward.1} parent=1 // pred_fallthru
      _
    %542 = vsyncpa [#allocation3], 1
    %543 = vsyncpa [#allocation5], 1

</llo_original>
